<compile_context>
chip_gen: v6e
topology: v6e:2x2x1
jax: 0.10.0
libtpu: 0.0.40
codegen_flags: <defaults>
</compile_context>

<pallas_src>
import jax
import jax.numpy as jnp
from jax.experimental import pallas as pl
from jax.experimental.pallas import tpu as pltpu


# --------------------------------------------------------------------------
# Kernel 1: FiLM projection (single invocation, no grid).
#   gamma = tanh(cond @ Wg + bg)       beta = cond @ Wb + bb
# Two separate outputs: tanh is applied only to gamma, and the wrapper needs
# no slicing of a fused [gamma|beta] buffer.
# --------------------------------------------------------------------------
def film_proj_kernel(cond_ref, wg_ref, bg_ref, wb_ref, bb_ref,
                     gamma_ref, beta_ref):
    cond = cond_ref[...]
    g = jnp.dot(cond, wg_ref[...], preferred_element_type=jnp.float32)
    gamma_ref[...] = jnp.tanh(g + bg_ref[...].astype(jnp.float32))
    b = jnp.dot(cond, wb_ref[...], preferred_element_type=jnp.float32)
    beta_ref[...] = b + bb_ref[...].astype(jnp.float32)


# --------------------------------------------------------------------------
# Kernel 2: modulation — pure HBM-streaming gamma * x + beta.
#   x, out : (B*C, H*W) tiles (lane-dense)
#   gamma, beta : (B*C, 1) tiles, broadcast over the lane (spatial) axis
# --------------------------------------------------------------------------
def film_mod_kernel(gamma_ref, beta_ref, x_ref, o_ref):
    o_ref[...] = (gamma_ref[...] * x_ref[...] + beta_ref[...]).astype(o_ref.dtype)


def _pick_tile(dim, cap, align):
    """Largest tile <= cap that is the full dim or an align-multiple divisor
    of dim; falls back to the aligned cap (Pallas masks ragged edge blocks)."""
    if dim <= cap:
        return dim
    t = (cap // align) * align
    while t >= align:
        if dim % t == 0:
            return t
        t -= align
    return (cap // align) * align


def _vmem_capacity_bytes():
    """Trace-time VMEM capacity query; conservative (v7x-sized) fallback."""
    try:
        cap = getattr(pltpu.get_tpu_info(), "vmem_capacity_bytes", None)
        if cap:
            return int(cap)
    except Exception:
        pass
    return 64 * 1024 * 1024


def _choose_mod_tiling(M, HW, itemsize):
    """Generation-aware tile sizes / VMEM limit for the streaming kernel."""
    vmem_cap = _vmem_capacity_bytes()
    if vmem_cap >= 100 * 1024 * 1024:
        # v5e / v6e: 128 MiB physical VMEM -> raise scoped limit, bigger tiles.
        vmem_limit = 64 * 1024 * 1024
        tile_bytes = 8 * 1024 * 1024      # x tile; 2x(x)+2x(out) ~ 32 MiB in flight
    else:
        # v7x: 64 MiB physical VMEM -> keep 4 in-flight buffers <= ~24 MiB.
        vmem_limit = 32 * 1024 * 1024
        tile_bytes = 6 * 1024 * 1024

    # Sub-32-bit dtypes pack rows along sublanes: align tm to the packed row group.
    sub_align = 8 * max(1, 4 // max(1, itemsize))

    tn = _pick_tile(HW, 4096, 128)                              # lane-dense cols
    tm_cap = max(sub_align, tile_bytes // max(1, tn * itemsize))
    tm_cap = max(sub_align, (tm_cap // sub_align) * sub_align)
    tm = _pick_tile(M, tm_cap, sub_align)

    # Keep enough grid blocks for v7x's two TensorCores and DMA pipelining.
    def n_blocks(a, b):
        return pl.cdiv(M, a) * pl.cdiv(HW, b)

    while n_blocks(tm, tn) < 8:
        if tm >= 2 * sub_align:
            tm = max(sub_align, ((tm // 2) // sub_align) * sub_align)
        elif tn >= 2 * 128:
            tn = max(128, ((tn // 2) // 128) * 128)
        else:
            break
    return tm, tn, vmem_limit


def film_forward(x, condition, w_gamma, b_gamma, w_beta, b_beta, *,
                 donate_x=False):
    """x: (B, C, H, W); condition: (B, F_in). Returns (B, C, H, W)."""
    B, C, H, W = x.shape
    HW = H * W
    M = B * C

    # ---- projection: one small pallas_call, everything resident in VMEM ----
    vmem = pl.BlockSpec(memory_space=pltpu.MemorySpace.VMEM)
    gamma, beta = pl.pallas_call(
        film_proj_kernel,
        out_shape=(jax.ShapeDtypeStruct((B, C), jnp.float32),
                   jax.ShapeDtypeStruct((B, C), jnp.float32)),
        in_specs=[vmem, vmem, vmem, vmem, vmem],
        out_specs=(vmem, vmem),
    )(condition, w_gamma, b_gamma.reshape(1, C), w_beta, b_beta.reshape(1, C))
    gamma = gamma.reshape(M, 1)                                  # (B*C, 1) f32
    beta = beta.reshape(M, 1)                                    # (B*C, 1) f32

    # ---- modulation: tiled, double-buffered streaming kernel ----
    x2 = x.reshape(M, HW)                                        # native dtype
    tm, tn, vmem_limit = _choose_mod_tiling(M, HW, x.dtype.itemsize)
    grid = (pl.cdiv(M, tm), pl.cdiv(HW, tn))

    out2 = pl.pallas_call(
        film_mod_kernel,
        out_shape=jax.ShapeDtypeStruct((M, HW), x.dtype),
        grid_spec=pltpu.PrefetchScalarGridSpec(
            num_scalar_prefetch=0,
            grid=grid,
            in_specs=[
                pl.BlockSpec((tm, 1), lambda i, j: (i, 0)),   # gamma: resident over j
                pl.BlockSpec((tm, 1), lambda i, j: (i, 0)),   # beta:  resident over j
                pl.BlockSpec((tm, tn), lambda i, j: (i, j)),  # x tile
            ],
            out_specs=pl.BlockSpec((tm, tn), lambda i, j: (i, j)),
        ),
        compiler_params=pltpu.CompilerParams(
            dimension_semantics=("parallel", "parallel"),
            vmem_limit_bytes=vmem_limit,
        ),
        input_output_aliases=({2: 0} if donate_x else {}),
    )(gamma, beta, x2)
    return out2.reshape(B, C, H, W)


def init_film_params(key, in_features, out_features):
    """Deterministic init matching nn.Linear's uniform(-1/sqrt(in), 1/sqrt(in))."""
    k1, k2, k3, k4 = jax.random.split(key, 4)
    bound = 1.0 / jnp.sqrt(jnp.float32(in_features))
    # PyTorch stores weight as (out, in); we keep (in, out) for cond @ W.
    w_gamma = jax.random.uniform(k1, (in_features, out_features), jnp.float32,
                                 -bound, bound)
    b_gamma = jax.random.uniform(k2, (out_features,), jnp.float32, -bound, bound)
    w_beta = jax.random.uniform(k3, (in_features, out_features), jnp.float32,
                                -bound, bound)
    b_beta = jax.random.uniform(k4, (out_features,), jnp.float32, -bound, bound)
    return w_gamma, b_gamma, w_beta, b_beta


if __name__ == "__main__":
    # Small, module-consistent shapes.
    B, C, H, W = 2, 4, 16, 16          # x: NCHW, C == out_features
    F_in = 8                            # condition feature dim (in_features)

    key = jax.random.PRNGKey(0)
    kx, kc, kp = jax.random.split(key, 3)
    x = jax.random.normal(kx, (B, C, H, W), jnp.float32)
    condition = jax.random.normal(kc, (B, F_in), jnp.float32)
    w_gamma, b_gamma, w_beta, b_beta = init_film_params(kp, F_in, C)

    out = film_forward(x, condition, w_gamma, b_gamma, w_beta, b_beta)
    out = jax.block_until_ready(out)

    # Pure-JAX reference check.
    gamma_ref = jnp.tanh(condition @ w_gamma + b_gamma)
    beta_ref = condition @ w_beta + b_beta
    ref = gamma_ref[:, :, None, None] * x + beta_ref[:, :, None, None]
    assert out.shape == (B, C, H, W)
    assert jnp.allclose(out, ref, atol=1e-5, rtol=1e-5)

    print("KERNEL_OK")
</pallas_src>

<mosaic_0001>
module attributes {stable_mosaic.version = 11 : i64} {
  func.func @film_proj_kernel(%arg0: memref<2x8xf32, #tpu.memory_space<vmem>>, %arg1: memref<8x4xf32, #tpu.memory_space<vmem>>, %arg2: memref<1x4xf32, #tpu.memory_space<vmem>>, %arg3: memref<8x4xf32, #tpu.memory_space<vmem>>, %arg4: memref<1x4xf32, #tpu.memory_space<vmem>>, %arg5: memref<2x4xf32, #tpu.memory_space<vmem>>, %arg6: memref<2x4xf32, #tpu.memory_space<vmem>>) attributes {dimension_semantics = [], scalar_prefetch = 0 : i64, scratch_operands = 0 : i64, tpu.core_type = #tpu.core_type<tc>} {
    %c0 = arith.constant 0 : index
    %c0_0 = arith.constant 0 : index
    %0 = vector.load %arg0[%c0, %c0_0] : memref<2x8xf32, #tpu.memory_space<vmem>>, vector<2x8xf32>
    %c0_1 = arith.constant 0 : index
    %c0_2 = arith.constant 0 : index
    %1 = vector.load %arg1[%c0_1, %c0_2] : memref<8x4xf32, #tpu.memory_space<vmem>>, vector<8x4xf32>
    %cst = arith.constant dense<0.000000e+00> : vector<2x4xf32>
    %2 = tpu.matmul %0, %1, %cst {dimension_numbers = #tpu.dot_dimension_numbers<[1], [0], [0], [1], [0, 0, 1, 1], [], []>} : vector<2x8xf32>, vector<8x4xf32>, vector<2x4xf32> -> vector<2x4xf32>
    %c0_3 = arith.constant 0 : index
    %c0_4 = arith.constant 0 : index
    %3 = vector.load %arg2[%c0_3, %c0_4] : memref<1x4xf32, #tpu.memory_space<vmem>>, vector<1x4xf32>
    %4 = vector.broadcast %3 : vector<1x4xf32> to vector<2x4xf32>
    %5 = arith.addf %2, %4 : vector<2x4xf32>
    %6 = math.tanh %5 : vector<2x4xf32>
    %c0_5 = arith.constant 0 : index
    %c0_6 = arith.constant 0 : index
    %7 = vector.load %arg5[%c0_5, %c0_6] : memref<2x4xf32, #tpu.memory_space<vmem>>, vector<2x4xf32>
    tpu.vector_store %arg5[%c0_5, %c0_6], %6 {strides = array<i32>} : memref<2x4xf32, #tpu.memory_space<vmem>>, vector<2x4xf32>,
    %c0_7 = arith.constant 0 : index
    %c0_8 = arith.constant 0 : index
    %8 = vector.load %arg3[%c0_7, %c0_8] : memref<8x4xf32, #tpu.memory_space<vmem>>, vector<8x4xf32>
    %cst_9 = arith.constant dense<0.000000e+00> : vector<2x4xf32>
    %9 = tpu.matmul %0, %8, %cst_9 {dimension_numbers = #tpu.dot_dimension_numbers<[1], [0], [0], [1], [0, 0, 1, 1], [], []>} : vector<2x8xf32>, vector<8x4xf32>, vector<2x4xf32> -> vector<2x4xf32>
    %c0_10 = arith.constant 0 : index
    %c0_11 = arith.constant 0 : index
    %10 = vector.load %arg4[%c0_10, %c0_11] : memref<1x4xf32, #tpu.memory_space<vmem>>, vector<1x4xf32>
    %11 = vector.broadcast %10 : vector<1x4xf32> to vector<2x4xf32>
    %12 = arith.addf %9, %11 : vector<2x4xf32>
    %c0_12 = arith.constant 0 : index
    %c0_13 = arith.constant 0 : index
    %13 = vector.load %arg6[%c0_12, %c0_13] : memref<2x4xf32, #tpu.memory_space<vmem>>, vector<2x4xf32>
    tpu.vector_store %arg6[%c0_12, %c0_13], %12 {strides = array<i32>} : memref<2x4xf32, #tpu.memory_space<vmem>>, vector<2x4xf32>,
    return
  }
}

</mosaic_0001>

<llo_original>
// kernel: tpu_custom_call.1
$region0: #{tpu_custom_call.1}
  #allocation0 [shape = 'u32[]', space=smem, size = 0x4, offset = 0x4, fixed_abs, tag = 'smem constant byte address 0x4 - core index']
  #allocation1 [shape = 'u32[144,128]{1,0:T(1,128)}', space=vmem, size = 0x12000, scoped, tag = 'internal scratch']
  %s0 = inlined_call_operand.vmem [shape: f32[2,8], index: 0, kind: input, shape index: {}]
  %s1 = inlined_call_operand.vmem [shape: f32[8,4], index: 1, kind: input, shape index: {}]
  %s2 = inlined_call_operand.vmem [shape: f32[1,4], index: 2, kind: input, shape index: {}]
  %s3 = inlined_call_operand.vmem [shape: f32[8,4], index: 3, kind: input, shape index: {}]
  %s4 = inlined_call_operand.vmem [shape: f32[1,4], index: 4, kind: input, shape index: {}]
  %s5 = inlined_call_operand.hbm [shape: f32[2,4], index: 5, kind: output, shape index: {0}]
  %s6 = inlined_call_operand.hbm [shape: f32[2,4], index: 6, kind: output, shape index: {1}]
  %7 = xla_tuple %s5, %s6
  %s8 = sld [smem:[#allocation0]]
  $region38: #{tpu_custom_call.1} parent=0
    _
  %s10 = ssub.s32 1, %s8
  %s11 = scalar_select 0, %s10, %s8
  $region1: #{tpu_custom_call.1} parent=0
    #allocation2 [shape = 'u8[1024]{0}', space=vmem, size = 0x400, scoped, tag = 'output window, operand 0, single buffered']
    #allocation3 [shape = 's32[1]{0}', space=sflag, size = 0x4, scoped, tag = 'scoped memory for tpu_custom_call.1']
    #allocation4 [shape = 'u8[1024]{0}', space=vmem, size = 0x400, scoped, tag = 'output window, operand 1, single buffered']
    #allocation5 [shape = 's32[1]{0}', space=sflag, size = 0x4, scoped, tag = 'scoped memory for tpu_custom_call.1']
    %12 = vsyncpa [#allocation3], 0
    %13 = vsyncpa [#allocation5], 0
    // Predicated region
    $region2: #{tpu_custom_call.1} parent=1 // pred_check
      _
    $region3: #{tpu_custom_call.1} parent=1 // pred_check_branch
      %15 = sbr.rel (0) target = $region5
    $region4: #{tpu_custom_call.1} parent=1 // pred_region
      _
    $region5: #{tpu_custom_call.1} parent=1 // pred_fallthru
      _
    // Predicated region
    $region6: #{tpu_custom_call.1} parent=1 // pred_check
      _
    $region7: #{tpu_custom_call.1} parent=1 // pred_check_branch
      %17 = sbr.rel (0) target = $region9
    $region8: #{tpu_custom_call.1} parent=1 // pred_region
      _
    $region9: #{tpu_custom_call.1} parent=1 // pred_fallthru
      _
    // Predicated region
    $region10: #{tpu_custom_call.1} parent=1 // pred_check
      _
    $region11: #{tpu_custom_call.1} parent=1 // pred_check_branch
      %19 = sbr.rel (0) target = $region13
    $region12: #{tpu_custom_call.1} parent=1 // pred_region
      _
    $region13: #{tpu_custom_call.1} parent=1 // pred_fallthru
      _
    // Predicated region
    $region14: #{tpu_custom_call.1} parent=1 // pred_check
      _
    $region15: #{tpu_custom_call.1} parent=1 // pred_check_branch
      %21 = sbr.rel (0) target = $region17
    $region16: #{tpu_custom_call.1} parent=1 // pred_region
      _
    $region17: #{tpu_custom_call.1} parent=1 // pred_fallthru
      _
    // Predicated region
    $region18: #{tpu_custom_call.1} parent=1 // pred_check
      _
    $region19: #{tpu_custom_call.1} parent=1 // pred_check_branch
      %23 = sbr.rel (0) target = $region21
    $region20: #{tpu_custom_call.1} parent=1 // pred_region
      _
    $region21: #{tpu_custom_call.1} parent=1 // pred_fallthru
      _
    %v24 = vld [vmem:[%s0] sm:$0x3]
    %v25 = vld [vmem:[%s1] sm:$0xff]
    %v26 = vld [vmem:[%s2] sm:$0x1]
    %v28 = vlaneseq
    %v29 = vshrl.u32 %v28, 7
    %v30 = vsub.s32 0, %v29
    %v31 = vrot.slane %v26, %v30
    %vm33 = vcmask 64512
    %v35 = vsel %vm33, %v24, 0
    %37 = vmatprep.subr.mxu0 0.0
    %38 = vmatpush1.msra.mxu0 0.0
    %39 = vmatprep.subr.mxu0 0.0
    %40 = vmatpush1.msra.mxu0 0.0
    %41 = vmatprep.subr.mxu0 0.0
    %42 = vmatpush1.msra.mxu0 0.0
    %43 = vmatprep.subr.mxu0 0.0
    %44 = vmatpush1.msra.mxu0 0.0
    %45 = vmatprep.subr.mxu0 0.0
    %46 = vmatpush1.msra.mxu0 0.0
    %47 = vmatprep.subr.mxu0 0.0
    %48 = vmatpush1.msra.mxu0 0.0
    %49 = vmatprep.subr.mxu0 0.0
    %50 = vmatpush1.msra.mxu0 0.0
    %51 = vmatprep.subr.mxu0 0.0
    %52 = vmatpush1.msra.mxu0 0.0
    %53 = vmatprep.subr.mxu0 0.0
    %54 = vmatpush1.msra.mxu0 0.0
    %55 = vmatprep.subr.mxu0 0.0
    %56 = vmatpush1.msra.mxu0 0.0
    %57 = vmatprep.subr.mxu0 0.0
    %58 = vmatpush1.msra.mxu0 0.0
    %59 = vmatprep.subr.mxu0 0.0
    %60 = vmatpush1.msra.mxu0 0.0
    %61 = vmatprep.subr.mxu0 0.0
    %62 = vmatpush1.msra.mxu0 0.0
    %63 = vmatprep.subr.mxu0 0.0
    %64 = vmatpush1.msra.mxu0 0.0
    %65 = vmatprep.subr.mxu0 0.0
    %66 = vmatpush1.msra.mxu0 0.0
    %67 = vmatprep.subr.mxu0 0.0
    %68 = vmatpush1.msra.mxu0 %v25
    %69 = vmatprep.subr.mxu0 0.0
    %70 = vmatpush2.msra.mxu0 0.0
    %71 = vmatprep.subr.mxu0 0.0
    %72 = vmatpush2.msra.mxu0 0.0
    %73 = vmatprep.subr.mxu0 0.0
    %74 = vmatpush2.msra.mxu0 0.0
    %75 = vmatprep.subr.mxu0 0.0
    %76 = vmatpush2.msra.mxu0 0.0
    %77 = vmatprep.subr.mxu0 0.0
    %78 = vmatpush2.msra.mxu0 0.0
    %79 = vmatprep.subr.mxu0 0.0
    %80 = vmatpush2.msra.mxu0 0.0
    %81 = vmatprep.subr.mxu0 0.0
    %82 = vmatpush2.msra.mxu0 0.0
    %83 = vmatprep.subr.mxu0 0.0
    %84 = vmatpush2.msra.mxu0 0.0
    %85 = vmatprep.subr.mxu0 0.0
    %86 = vmatpush2.msra.mxu0 0.0
    %87 = vmatprep.subr.mxu0 0.0
    %88 = vmatpush2.msra.mxu0 0.0
    %89 = vmatprep.subr.mxu0 0.0
    %90 = vmatpush2.msra.mxu0 0.0
    %91 = vmatprep.subr.mxu0 0.0
    %92 = vmatpush2.msra.mxu0 0.0
    %93 = vmatprep.subr.mxu0 0.0
    %94 = vmatpush2.msra.mxu0 0.0
    %95 = vmatprep.subr.mxu0 0.0
    %96 = vmatpush2.msra.mxu0 0.0
    %97 = vmatprep.subr.mxu0 0.0
    %98 = vmatpush2.msra.mxu0 0.0
    %99 = vmatprep.subr.mxu0 0.0
    %100 = vmatpush2.msra.mxu0 0.0
    %101 = vmatprep.mubr.f32.mxu0 0.0
    %102 = vmatmul.mubr.f32.gmra.mxu0 %v35
    %v103 = vpop.f32.mrf.mxu0
    %v104 = vadd.f32 %v31, %v103
    %v105 = vpop.f32.mrf.mxu0
    %106 = vdwg.mxu0
    %v107 = vtanh.pop %v104
    %vm108 = vcmask 25600
    %109 = vst.msk [vmem:[#allocation2] sm:$0x3] %vm108, %v107
    %v110 = vld [vmem:[%s3] sm:$0xff]
    %v111 = vld [vmem:[%s4] sm:$0x1]
    %v113 = vlaneseq
    %v114 = vshrl.u32 %v113, 7
    %v115 = vsub.s32 0, %v114
    %v116 = vrot.slane %v111, %v115
    %118 = vmatprep.subr.mxu0 0.0
    %119 = vmatpush1.msra.mxu0 0.0
    %120 = vmatprep.subr.mxu0 0.0
    %121 = vmatpush1.msra.mxu0 0.0
    %122 = vmatprep.subr.mxu0 0.0
    %123 = vmatpush1.msra.mxu0 0.0
    %124 = vmatprep.subr.mxu0 0.0
    %125 = vmatpush1.msra.mxu0 0.0
    %126 = vmatprep.subr.mxu0 0.0
    %127 = vmatpush1.msra.mxu0 0.0
    %128 = vmatprep.subr.mxu0 0.0
    %129 = vmatpush1.msra.mxu0 0.0
    %130 = vmatprep.subr.mxu0 0.0
    %131 = vmatpush1.msra.mxu0 0.0
    %132 = vmatprep.subr.mxu0 0.0
    %133 = vmatpush1.msra.mxu0 0.0
    %134 = vmatprep.subr.mxu0 0.0
    %135 = vmatpush1.msra.mxu0 0.0
    %136 = vmatprep.subr.mxu0 0.0
    %137 = vmatpush1.msra.mxu0 0.0
    %138 = vmatprep.subr.mxu0 0.0
    %139 = vmatpush1.msra.mxu0 0.0
    %140 = vmatprep.subr.mxu0 0.0
    %141 = vmatpush1.msra.mxu0 0.0
    %142 = vmatprep.subr.mxu0 0.0
    %143 = vmatpush1.msra.mxu0 0.0
    %144 = vmatprep.subr.mxu0 0.0
    %145 = vmatpush1.msra.mxu0 0.0
    %146 = vmatprep.subr.mxu0 0.0
    %147 = vmatpush1.msra.mxu0 0.0
    %148 = vmatprep.subr.mxu0 0.0
    %149 = vmatpush1.msra.mxu0 %v110
    %150 = vmatprep.subr.mxu0 0.0
    %151 = vmatpush2.msra.mxu0 0.0
    %152 = vmatprep.subr.mxu0 0.0
    %153 = vmatpush2.msra.mxu0 0.0
    %154 = vmatprep.subr.mxu0 0.0
    %155 = vmatpush2.msra.mxu0 0.0
    %156 = vmatprep.subr.mxu0 0.0
    %157 = vmatpush2.msra.mxu0 0.0
    %158 = vmatprep.subr.mxu0 0.0
    %159 = vmatpush2.msra.mxu0 0.0
    %160 = vmatprep.subr.mxu0 0.0
    %161 = vmatpush2.msra.mxu0 0.0
    %162 = vmatprep.subr.mxu0 0.0
    %163 = vmatpush2.msra.mxu0 0.0
    %164 = vmatprep.subr.mxu0 0.0
    %165 = vmatpush2.msra.mxu0 0.0
    %166 = vmatprep.subr.mxu0 0.0
    %167 = vmatpush2.msra.mxu0 0.0
    %168 = vmatprep.subr.mxu0 0.0
    %169 = vmatpush2.msra.mxu0 0.0
    %170 = vmatprep.subr.mxu0 0.0
    %171 = vmatpush2.msra.mxu0 0.0
    %172 = vmatprep.subr.mxu0 0.0
    %173 = vmatpush2.msra.mxu0 0.0
    %174 = vmatprep.subr.mxu0 0.0
    %175 = vmatpush2.msra.mxu0 0.0
    %176 = vmatprep.subr.mxu0 0.0
    %177 = vmatpush2.msra.mxu0 0.0
    %178 = vmatprep.subr.mxu0 0.0
    %179 = vmatpush2.msra.mxu0 0.0
    %180 = vmatprep.subr.mxu0 0.0
    %181 = vmatpush2.msra.mxu0 0.0
    %182 = vmatprep.mubr.f32.mxu0 0.0
    %183 = vmatmul.mubr.f32.gmra.mxu0 %v35
    %v184 = vpop.f32.mrf.mxu0
    %v185 = vadd.f32 %v116, %v184
    %v186 = vpop.f32.mrf.mxu0
    %187 = vdwg.mxu0
    %188 = vst.msk [vmem:[#allocation4] sm:$0x3] %vm108, %v185
    // Predicated region
    $region22: #{tpu_custom_call.1} parent=1 // pred_check
      _
    $region23: #{tpu_custom_call.1} parent=1 // pred_check_branch
      %190 = sbr.rel (0) target = $region25
    $region24: #{tpu_custom_call.1} parent=1 // pred_region
      %s192 = ssub.s32 32, 32
      %193 = vsyncadd [#allocation3], %s192
      %s195 = sshll.u32 [#allocation2], 4
      %s196 = int_to_ptr.vmem [resolvable:$true] %s195
      %198 = dma.vmem_to_hbm [thread:$0]  %s196, 32, %s5, [#allocation3]
    $region25: #{tpu_custom_call.1} parent=1 // pred_fallthru
      _
    // Predicated region
    $region26: #{tpu_custom_call.1} parent=1 // pred_check
      _
    $region27: #{tpu_custom_call.1} parent=1 // pred_check_branch
      %200 = sbr.rel (0) target = $region29
    $region28: #{tpu_custom_call.1} parent=1 // pred_region
      %s202 = ssub.s32 32, 32
      %203 = vsyncadd [#allocation5], %s202
      %s205 = sshll.u32 [#allocation4], 4
      %s206 = int_to_ptr.vmem [resolvable:$true] %s205
      %208 = dma.vmem_to_hbm [thread:$0]  %s206, 32, %s6, [#allocation5]
    $region29: #{tpu_custom_call.1} parent=1 // pred_fallthru
      _
    // Predicated region
    $region30: #{tpu_custom_call.1} parent=1 // pred_check
      _
    $region31: #{tpu_custom_call.1} parent=1 // pred_check_branch
      %210 = sbr.rel (0) target = $region33
    $region32: #{tpu_custom_call.1} parent=1 // pred_region
      %211 = dma.done [#allocation3], 32
    $region33: #{tpu_custom_call.1} parent=1 // pred_fallthru
      _
    // Predicated region
    $region34: #{tpu_custom_call.1} parent=1 // pred_check
      _
    $region35: #{tpu_custom_call.1} parent=1 // pred_check_branch
      %213 = sbr.rel (0) target = $region37
    $region36: #{tpu_custom_call.1} parent=1 // pred_region
      %214 = dma.done [#allocation5], 32
    $region37: #{tpu_custom_call.1} parent=1 // pred_fallthru
      _
    %215 = vsyncpa [#allocation3], 1
    %216 = vsyncpa [#allocation5], 1

</llo_original>
